<compile_context>
chip_gen: v7x
topology: tpu7x:2x2x1
jax: 0.10.0
libtpu: 0.0.40
codegen_flags: <defaults>
</compile_context>

<pallas_src>
import functools
import inspect

import numpy as np

import jax
import jax.numpy as jnp
from jax.experimental import pallas as pl
from jax.experimental.pallas import tpu as pltpu

_MIB = 1024 * 1024


def _round_up(x, m):
    return ((x + m - 1) // m) * m


# ---------------------------------------------------------------------------
# Constant DFT operands (host-built, float64-accurate, cached per config).
# ---------------------------------------------------------------------------
@functools.lru_cache(maxsize=None)
def _dft_cos_sin(n):
    """Real/imag parts of scipy.linalg.dft(n) = exp(-2*pi*i*j*k/n) in float64.

    (j*k) is reduced mod n exactly in integers before scaling, so the angle stays
    accurate for large n, keeping parity with the complex128 PyTorch reference."""
    j = np.arange(n, dtype=np.int64)
    jk = (j[:, None] * j[None, :]) % n
    ang = (-2.0 * np.pi / n) * jk.astype(np.float64)
    return np.cos(ang), np.sin(ang)


@functools.lru_cache(maxsize=None)
def _fourier_operands(seq_len, hidden, s_pad, d_pad, dtype_name):
    """Device-resident, zero-padded DFT operands (shared across all FNet layers)."""
    hr, hi = _dft_cos_sin(hidden)
    sr, si = _dft_cos_sin(seq_len)

    hr_p = np.zeros((d_pad, d_pad), np.float64)
    hr_p[:hidden, :hidden] = hr
    hni_p = np.zeros((d_pad, d_pad), np.float64)      # minus sign folded into weights
    hni_p[:hidden, :hidden] = -hi

    # S_cat = [Sr | Si], laid out so its two halves line up with the (2, s_pad, .)
    # stage-1 scratch when that scratch is viewed as (2*s_pad, .).
    scat = np.zeros((s_pad, 2 * s_pad), np.float64)
    scat[:seq_len, :seq_len] = sr
    scat[:seq_len, s_pad:s_pad + seq_len] = si

    return (jnp.asarray(hr_p, dtype=dtype_name),
            jnp.asarray(hni_p, dtype=dtype_name),
            jnp.asarray(scat, dtype=dtype_name))


# ---------------------------------------------------------------------------
# Kernel
# ---------------------------------------------------------------------------
def _fourier_mm_kernel(x_ref, hr_ref, hni_ref, scat_ref, o_ref, t_ref, *, precision):
    bt, s_pad, d_pad = x_ref.shape
    dn = o_ref.shape[-1]

    # Stage 1: hidden-axis DFT with the batch folded into the matmul M dim.  The
    # real / negated-imag halves are stored once, in their final stage-2 layout,
    # into the VMEM scratch t_ref of shape (bt, 2, s_pad, dn).
    x2d = x_ref[...].reshape(bt * s_pad, d_pad)       # free leading-dim collapse
    tr = jnp.dot(x2d, hr_ref[...], precision=precision,
                 preferred_element_type=jnp.float32)
    ti = jnp.dot(x2d, hni_ref[...], precision=precision,
                 preferred_element_type=jnp.float32)
    t_ref[:, 0] = tr.reshape(bt, s_pad, dn).astype(t_ref.dtype)
    t_ref[:, 1] = ti.reshape(bt, s_pad, dn).astype(t_ref.dtype)

    # Stage 2: seq-axis DFT.  real(S X H) = [Sr | Si] @ [[X Hr], [-(X Hi)]] is a
    # single (s, 2s) @ (2s, dn) matmul per batch element: K doubled for the MXU,
    # one clean accumulation chain, no intermediate casts between partial dots.
    scat = scat_ref[...]

    def body(bi, carry):
        tb = t_ref[bi].reshape(2 * s_pad, dn)          # free leading-dim collapse
        o_ref[bi] = jnp.dot(scat, tb, precision=precision,
                            preferred_element_type=jnp.float32).astype(o_ref.dtype)
        return carry

    jax.lax.fori_loop(0, bt, body, 0, unroll=True)     # bounded live ranges


# ---------------------------------------------------------------------------
# Wrapper helpers
# ---------------------------------------------------------------------------
def _vmem_capacity_bytes():
    """Physical per-core VMEM: 64 MiB on v7x, 128 MiB on v5e/v6e."""
    try:
        cap = getattr(pltpu.get_tpu_info(), "vmem_capacity_bytes", None)
        if cap:
            return int(cap)
    except Exception:
        pass
    try:
        if "v7" in jax.devices()[0].device_kind.lower():
            return 64 * _MIB
    except Exception:
        pass
    return 128 * _MIB


def _pipeline_mode_supported():
    """Targeted feature check for BlockSpec(pipeline_mode=pl.Buffered(...))."""
    if not hasattr(pl, "Buffered"):
        return False
    try:
        return "pipeline_mode" in inspect.signature(pl.BlockSpec).parameters
    except (TypeError, ValueError):
        return False


def _choose_hidden_tile(d_pad, op_bytes, vmem_cap):
    """Column-tile width for the hidden-DFT operands (a 128-multiple divisor of d_pad)."""
    budget = vmem_cap // 4                       # constants' share of VMEM
    if 2 * d_pad * d_pad * op_bytes <= budget:   # Hr + (-Hi) resident at full width
        return d_pad
    m = d_pad // 128
    for k in range(m, 0, -1):                    # largest fitting divisor, double-buffered
        if m % k == 0 and 2 * d_pad * (128 * k) * op_bytes * 2 <= budget:
            return 128 * k
    return 128


def _choose_batch_block(batch, s_pad, d_pad, dn, op_bytes, budget, vmem_cap):
    """Batch rows per grid step: fill the stage-1 M dim under the VMEM budget,
    keep the stage-2 unroll short, and keep >= 2 grid steps for 2-TC sharding."""
    target_rows = 2048 if vmem_cap >= 96 * _MIB else 1024

    def block_bytes(bt):
        return (bt * s_pad * d_pad * op_bytes * 2      # x block, double-buffered
                + bt * s_pad * dn * 4 * 2              # f32 out block, double-buffered
                + bt * 2 * s_pad * dn * op_bytes       # stage-1 VMEM scratch
                + bt * 2 * s_pad * dn * 4)             # stage-1 f32 temporaries

    cap = max(1, min(batch, max(1, target_rows // max(s_pad, 1)), 8))
    if batch >= 2:
        cap = min(cap, max(1, batch // 2))             # >= 2 batch grid steps (v7x 2 TCs)
    while cap > 1 and block_bytes(cap) > budget:
        cap -= 1
    for bt in range(cap, 0, -1):
        if batch % bt == 0:                            # every grid step is a full block
            return bt
    return 1


# ---------------------------------------------------------------------------
# Public wrapper
# ---------------------------------------------------------------------------
def fourier_mm_layer(hidden_states, max_position_embeddings, hidden_size, *,
                     compute_dtype=jnp.float32, precision=None):
    """hidden_states: (B, S, D) real; returns float32 (B, S, D)
    = real(DFT_seq @ X @ DFT_hidden).

    compute_dtype=jnp.bfloat16 runs both matmul stages with bf16 operands and f32
    accumulation (~2-4x MXU throughput on v5e/v6e/v7x).  The default float32 path
    keeps full-precision Mosaic matmuls; pass precision=jax.lax.Precision.HIGHEST
    to force it explicitly if strict complex128 parity is required."""
    b, s, d = hidden_states.shape
    assert s == max_position_embeddings and d == hidden_size

    op_dtype = np.dtype(compute_dtype)
    op_bytes = op_dtype.itemsize

    # Lane/sublane alignment: pad D to a multiple of 128 and S to a multiple of 8
    # host-side (zero padding keeps the DFT exact); slice the output back after.
    d_pad = _round_up(d, 128)
    s_pad = _round_up(s, 8)

    hr, hni, scat = _fourier_operands(s, d, s_pad, d_pad, op_dtype.name)

    x = hidden_states.astype(op_dtype)
    if (s_pad, d_pad) != (s, d):
        x = jnp.pad(x, ((0, 0), (0, s_pad - s), (0, d_pad - d)))

    vmem_cap = _vmem_capacity_bytes()
    dn = _choose_hidden_tile(d_pad, op_bytes, vmem_cap)
    n_blocks = d_pad // dn

    # Conservative constant footprint: always budget as if double-buffered, so a
    # missing single-buffer feature can never overshoot physical VMEM.
    const_bytes = (2 * d_pad * dn + s_pad * 2 * s_pad) * op_bytes * 2
    budget = max(4 * _MIB, vmem_cap - const_bytes - 8 * _MIB)   # 8 MiB compiler headroom
    bt = _choose_batch_block(b, s_pad, d_pad, dn, op_bytes, budget, vmem_cap)
    grid = (pl.cdiv(b, bt), n_blocks)

    single_ok = _pipeline_mode_supported()

    def _const_spec(shape, index_map, resident):
        if resident and single_ok:
            # Resident constant: DMA'd once, single-buffered (VMEM headroom).
            return pl.BlockSpec(shape, index_map, pipeline_mode=pl.Buffered(1))
        return pl.BlockSpec(shape, index_map)

    hidden_resident = (n_blocks == 1)
    in_specs = [
        pl.BlockSpec((bt, s_pad, d_pad), lambda i, j: (i, 0, 0)),         # x (per batch block)
        _const_spec((d_pad, dn), lambda i, j: (0, j), hidden_resident),   # Hr  (col-tiled)
        _const_spec((d_pad, dn), lambda i, j: (0, j), hidden_resident),   # -Hi (col-tiled)
        _const_spec((s_pad, 2 * s_pad), lambda i, j: (0, 0), True),       # S_cat = [Sr | Si]
    ]
    out_specs = pl.BlockSpec((bt, s_pad, dn), lambda i, j: (i, 0, j))

    block_bytes = (bt * s_pad * d_pad * op_bytes * 2
                   + bt * s_pad * dn * 4 * 2
                   + bt * 2 * s_pad * dn * (op_bytes + 4))
    vmem_limit = int(min(vmem_cap - 4 * _MIB,                  # clamp to physical, headroom
                         max(32 * _MIB, block_bytes + const_bytes + 8 * _MIB)))

    flops = 4 * b * s_pad * d_pad * (d_pad + s_pad)
    bytes_accessed = (b * s_pad * d_pad * (op_bytes + 4)
                      + (2 * d_pad * d_pad + 2 * s_pad * s_pad) * op_bytes)
    cost = pl.CostEstimate(flops=flops, transcendentals=0,
                           bytes_accessed=bytes_accessed)

    out = pl.pallas_call(
        functools.partial(_fourier_mm_kernel, precision=precision),
        out_shape=jax.ShapeDtypeStruct((b, s_pad, d_pad), jnp.float32),
        grid_spec=pltpu.PrefetchScalarGridSpec(
            num_scalar_prefetch=0,
            grid=grid,
            in_specs=in_specs,
            out_specs=out_specs,
            scratch_shapes=[pltpu.VMEM((bt, 2, s_pad, dn), op_dtype)],
        ),
        compiler_params=pltpu.CompilerParams(
            dimension_semantics=("parallel", "parallel"),
            vmem_limit_bytes=vmem_limit),
        cost_estimate=cost,
    )(x, hr, hni, scat)

    if (s_pad, d_pad) != (s, d):
        out = out[:, :s, :d]
    return out


# ---------------------------------------------------------------------------
# Demo / correctness check
# ---------------------------------------------------------------------------
if __name__ == "__main__":
    # config: max_position_embeddings (seq) = 8, hidden_size = 32, batch = 2
    B, S, D = 2, 8, 32
    key = jax.random.PRNGKey(0)
    x = jax.random.normal(key, (B, S, D), dtype=jnp.float32)

    out = jax.block_until_ready(
        fourier_mm_layer(x, max_position_embeddings=S, hidden_size=D))

    # Reference: complex128 einsum, matching the PyTorch module semantics.
    sr64, si64 = _dft_cos_sin(S)
    hr64, hi64 = _dft_cos_sin(D)
    dft_seq = sr64 + 1j * si64
    dft_hid = hr64 + 1j * hi64
    x_np = np.asarray(x, dtype=np.complex128)
    ref = np.einsum('bij,jk,ni->bnk', x_np, dft_hid, dft_seq).real.astype(np.float32)

    assert out.shape == (B, S, D) and out.dtype == jnp.float32
    assert np.allclose(np.asarray(out), ref, rtol=1e-4, atol=1e-3), "f32 mismatch vs reference"

    # bf16-operand fast path (f32 accumulation): ~2-4x MXU throughput on v5e/v6e/v7x.
    out_bf16 = jax.block_until_ready(
        fourier_mm_layer(x, max_position_embeddings=S, hidden_size=D,
                         compute_dtype=jnp.bfloat16))
    assert np.allclose(np.asarray(out_bf16), ref, rtol=5e-2, atol=3e-1), \
        "bf16 mismatch vs reference"

    print("KERNEL_OK")
</pallas_src>

<mosaic_0001>
module attributes {stable_mosaic.version = 11 : i64} {
  func.func @_fourier_mm_kernel(%arg0: i32, %arg1: i32, %arg2: memref<1x8x128xf32, #tpu.memory_space<vmem>>, %arg3: memref<128x128xf32, #tpu.memory_space<vmem>>, %arg4: memref<128x128xf32, #tpu.memory_space<vmem>>, %arg5: memref<8x16xf32, #tpu.memory_space<vmem>>, %arg6: memref<1x8x128xf32, #tpu.memory_space<vmem>>, %arg7: memref<1x2x8x128xf32, #tpu.memory_space<vmem>>) attributes {dimension_semantics = [#tpu.dimension_semantics<parallel>, #tpu.dimension_semantics<parallel>], iteration_bounds = array<i64: 2, 1>, scalar_prefetch = 0 : i64, scratch_operands = 1 : i64, tpu.core_type = #tpu.core_type<tc>, window_params = [{transform_indices = @transform_0, window_bounds = array<i64: 1, 8, 128>}, {pipeline_mode = #tpu.pipeline_mode<synchronous>, transform_indices = @transform_1, window_bounds = array<i64: 128, 128>}, {pipeline_mode = #tpu.pipeline_mode<synchronous>, transform_indices = @transform_2, window_bounds = array<i64: 128, 128>}, {pipeline_mode = #tpu.pipeline_mode<synchronous>, transform_indices = @transform_3, window_bounds = array<i64: 8, 16>}, {transform_indices = @transform_4, window_bounds = array<i64: 1, 8, 128>}]} {
    %c0 = arith.constant 0 : index
    %c0_0 = arith.constant 0 : index
    %c0_1 = arith.constant 0 : index
    %0 = vector.load %arg2[%c0, %c0_0, %c0_1] : memref<1x8x128xf32, #tpu.memory_space<vmem>>, vector<1x8x128xf32>
    %1 = vector.shape_cast %0 : vector<1x8x128xf32> to vector<8x128xf32>
    %c0_2 = arith.constant 0 : index
    %c0_3 = arith.constant 0 : index
    %2 = vector.load %arg3[%c0_2, %c0_3] : memref<128x128xf32, #tpu.memory_space<vmem>>, vector<128x128xf32>
    %cst = arith.constant dense<0.000000e+00> : vector<8x128xf32>
    %3 = tpu.matmul %1, %2, %cst {dimension_numbers = #tpu.dot_dimension_numbers<[1], [0], [0], [1], [0, 0, 1, 1], [], []>} : vector<8x128xf32>, vector<128x128xf32>, vector<8x128xf32> -> vector<8x128xf32>
    %c0_4 = arith.constant 0 : index
    %c0_5 = arith.constant 0 : index
    %4 = vector.load %arg4[%c0_4, %c0_5] : memref<128x128xf32, #tpu.memory_space<vmem>>, vector<128x128xf32>
    %cst_6 = arith.constant dense<0.000000e+00> : vector<8x128xf32>
    %5 = tpu.matmul %1, %4, %cst_6 {dimension_numbers = #tpu.dot_dimension_numbers<[1], [0], [0], [1], [0, 0, 1, 1], [], []>} : vector<8x128xf32>, vector<128x128xf32>, vector<8x128xf32> -> vector<8x128xf32>
    %6 = vector.shape_cast %3 : vector<8x128xf32> to vector<1x8x128xf32>
    %c0_7 = arith.constant 0 : index
    %c0_8 = arith.constant 0 : index
    %c0_9 = arith.constant 0 : index
    %c0_10 = arith.constant 0 : index
    %7 = vector.load %arg7[%c0_7, %c0_8, %c0_9, %c0_10] : memref<1x2x8x128xf32, #tpu.memory_space<vmem>>, vector<1x1x8x128xf32>
    %8 = vector.shape_cast %7 : vector<1x1x8x128xf32> to vector<1x8x128xf32>
    %9 = vector.shape_cast %6 : vector<1x8x128xf32> to vector<1x1x8x128xf32>
    tpu.vector_store %arg7[%c0_7, %c0_8, %c0_9, %c0_10], %9 {strides = array<i32>} : memref<1x2x8x128xf32, #tpu.memory_space<vmem>>, vector<1x1x8x128xf32>,
    %10 = vector.shape_cast %5 : vector<8x128xf32> to vector<1x8x128xf32>
    %c0_11 = arith.constant 0 : index
    %c1 = arith.constant 1 : index
    %c0_12 = arith.constant 0 : index
    %c0_13 = arith.constant 0 : index
    %11 = vector.load %arg7[%c0_11, %c1, %c0_12, %c0_13] : memref<1x2x8x128xf32, #tpu.memory_space<vmem>>, vector<1x1x8x128xf32>
    %12 = vector.shape_cast %11 : vector<1x1x8x128xf32> to vector<1x8x128xf32>
    %13 = vector.shape_cast %10 : vector<1x8x128xf32> to vector<1x1x8x128xf32>
    tpu.vector_store %arg7[%c0_11, %c1, %c0_12, %c0_13], %13 {strides = array<i32>} : memref<1x2x8x128xf32, #tpu.memory_space<vmem>>, vector<1x1x8x128xf32>,
    %c0_14 = arith.constant 0 : index
    %c0_15 = arith.constant 0 : index
    %14 = vector.load %arg5[%c0_14, %c0_15] : memref<8x16xf32, #tpu.memory_space<vmem>>, vector<8x16xf32>
    %c0_i32 = arith.constant 0 : i32
    %15 = arith.index_cast %c0_i32 : i32 to index
    %c0_16 = arith.constant 0 : index
    %c0_17 = arith.constant 0 : index
    %c0_18 = arith.constant 0 : index
    %16 = vector.load %arg7[%15, %c0_16, %c0_17, %c0_18] : memref<1x2x8x128xf32, #tpu.memory_space<vmem>>, vector<1x2x8x128xf32>
    %17 = vector.shape_cast %16 : vector<1x2x8x128xf32> to vector<2x8x128xf32>
    %18 = vector.shape_cast %17 : vector<2x8x128xf32> to vector<16x128xf32>
    %cst_19 = arith.constant dense<0.000000e+00> : vector<8x128xf32>
    %19 = tpu.matmul %14, %18, %cst_19 {dimension_numbers = #tpu.dot_dimension_numbers<[1], [0], [0], [1], [0, 0, 1, 1], [], []>} : vector<8x16xf32>, vector<16x128xf32>, vector<8x128xf32> -> vector<8x128xf32>
    %20 = arith.index_cast %c0_i32 : i32 to index
    %c0_20 = arith.constant 0 : index
    %c0_21 = arith.constant 0 : index
    %21 = vector.load %arg6[%20, %c0_20, %c0_21] : memref<1x8x128xf32, #tpu.memory_space<vmem>>, vector<1x8x128xf32>
    %22 = vector.shape_cast %21 : vector<1x8x128xf32> to vector<8x128xf32>
    %23 = vector.shape_cast %19 : vector<8x128xf32> to vector<1x8x128xf32>
    tpu.vector_store %arg6[%20, %c0_20, %c0_21], %23 {strides = array<i32>} : memref<1x8x128xf32, #tpu.memory_space<vmem>>, vector<1x8x128xf32>,
    %c1_i32 = arith.constant 1 : i32
    return
  }
  func.func @transform_0(%arg0: i32, %arg1: i32) -> (i32, i32, i32) {
    %c0_i32 = arith.constant 0 : i32
    %c0_i32_0 = arith.constant 0 : i32
    %c0_i32_1 = arith.constant 0 : i32
    return %arg0, %c0_i32, %c0_i32_0 : i32, i32, i32
  }
  func.func @transform_1(%arg0: i32, %arg1: i32) -> (i32, i32) {
    %c0_i32 = arith.constant 0 : i32
    %c0_i32_0 = arith.constant 0 : i32
    return %c0_i32, %arg1 : i32, i32
  }
  func.func @transform_2(%arg0: i32, %arg1: i32) -> (i32, i32) {
    %c0_i32 = arith.constant 0 : i32
    %c0_i32_0 = arith.constant 0 : i32
    return %c0_i32, %arg1 : i32, i32
  }
  func.func @transform_3(%arg0: i32, %arg1: i32) -> (i32, i32) {
    %c0_i32 = arith.constant 0 : i32
    %c0_i32_0 = arith.constant 0 : i32
    %c0_i32_1 = arith.constant 0 : i32
    return %c0_i32, %c0_i32_0 : i32, i32
  }
  func.func @transform_4(%arg0: i32, %arg1: i32) -> (i32, i32, i32) {
    %c0_i32 = arith.constant 0 : i32
    %c0_i32_0 = arith.constant 0 : i32
    return %arg0, %c0_i32, %arg1 : i32, i32, i32
  }
}

</mosaic_0001>

<llo_original>
// kernel: tpu_custom_call.1
$region0: #{tpu_custom_call.1}
  #allocation0 [shape = 'u32[]', space=smem, size = 0x4, offset = 0x4, fixed_abs, tag = 'smem constant byte address 0x4 - core index']
  #allocation1 [shape = 'u32[144,128]{1,0:T(1,128)}', space=vmem, size = 0x12000, scoped, tag = 'internal scratch']
  #allocation2 [shape = 'f32[1,2,8,128]{3,2,1,0:T(8,128)}', space=vmem, size = 0x2000, scoped, tag = 'scratch operand']
  %s0 = inlined_call_operand.hbm [shape: f32[2,8,128], index: 0, kind: input, shape index: {}]
  %s1 = inlined_call_operand.hbm [shape: f32[128,128], index: 1, kind: input, shape index: {}]
  %s2 = inlined_call_operand.hbm [shape: f32[128,128], index: 2, kind: input, shape index: {}]
  %s3 = inlined_call_operand.vmem [shape: f32[8,16], index: 3, kind: input, shape index: {}]
  %s4 = inlined_call_operand.hbm [shape: f32[2,8,128], index: 4, kind: output, shape index: {}]
  %s5 = sld [smem:[#allocation0]]
  $region61: #{tpu_custom_call.1} parent=0
    _
  %s7 = ssub.s32 1, %s5
  %s8 = scalar_select 0, %s7, %s5
  $region1: #{tpu_custom_call.1} parent=0
    #allocation3 [shape = 'u8[8192]{0}', space=vmem, size = 0x2000, scoped, tag = 'input window, operand 0']
    #allocation4 [shape = 's32[2]{0}', space=sflag, size = 0x8, scoped, tag = 'scoped memory for tpu_custom_call.1']
    #allocation5 [shape = 's32[2]{0}', space=sflag, size = 0x8, scoped, tag = 'scoped memory for tpu_custom_call.1']
    #allocation6 [shape = 'u8[65536]{0}', space=vmem, size = 0x10000, scoped, tag = 'input window, operand 1, single buffered']
    #allocation7 [shape = 's32[1]{0}', space=sflag, size = 0x4, scoped, tag = 'scoped memory for tpu_custom_call.1']
    #allocation8 [shape = 'u8[65536]{0}', space=vmem, size = 0x10000, scoped, tag = 'input window, operand 2, single buffered']
    #allocation9 [shape = 'u8[8192]{0}', space=vmem, size = 0x2000, scoped, tag = 'output window, operand 0']
    %9 = vsyncpa [#allocation4], 0
    %s10 = scalar_lea.sflag [#allocation4], 1
    %11 = vsyncpa %s10, 0
    %12 = vsyncpa [#allocation7], 0
    %13 = vsyncpa [#allocation5], 0
    %s14 = scalar_lea.sflag [#allocation5], 1
    %15 = vsyncpa %s14, 0
    loop: start=0, step=1, limit=4
    $region2: #{tpu_custom_call.1} parent=1 // loop_pre_header
      _
    $region3: #{tpu_custom_call.1} parent=1 // loop_header
      %s17 = sphi 0, %s21
      %p18 = scmp.ge.s32.totalorder %s17, 4
      %s24 = sphi 0, %s36
      %s25 = sphi 0, %s32
      %s26 = sphi 0, %s24
      %s27 = sphi 0, %s25
      %s28 = sphi 0, %s26
      %s29 = sphi 0, %s27
      %s39 = sphi 0, %s41
      %s42 = sphi 0, %s39
      %s43 = sphi 0, %s42
      %s59 = sphi 0, %s43
      %s65 = sphi 0, %s67
      %s68 = sphi 0, %s65
      %s69 = sphi 0, %s68
      %s85 = sphi 0, %s69
      %s91 = sphi 0, %s93
      %s94 = sphi 0, %s91
      %s95 = sphi 0, %s94
      %s111 = sphi 0, %s95
      %s115 = sphi 0, %s115
      %s117 = sphi 0, %s115
      %s118 = sphi 0, %s117
      %s132 = sphi 0, %s118
      %s140 = sphi 0, %s142
      %s143 = sphi 0, %s140
      %s144 = sphi 0, %s143
      %s160 = sphi 0, %s144
    $region4: #{tpu_custom_call.1} parent=1 // loop_header_branch
      %20 = sbr.rel (%p18) target = $region8
    $region5: #{tpu_custom_call.1} parent=1 // loop_body
      %s22 = ssub.s32 %s17, 1
      %s23 = ssub.s32 %s17, 2
      %s30 = sadd.s32 1, %s25
      %p31 = scmp.ge.s32.totalorder %s30, 1
      %s32 = scalar_select %p31, 0, %s30
      %s33 = sadd.s32 1, %s24
      %s34 = scalar_select %p31, %s33, %s24
      %p35 = scmp.ge.s32.totalorder %s34, 2
      %s36 = scalar_select %p35, 0, %s34
      %s37 = ssub.s32 %s24, %s36
      %p38 = scmp.eq.s32.totalorder %s37, 0
      %s40 = sadd.s32 %s39, 1
      %s41 = scalar_select %p38, %s39, %s40
      %p44 = pneg %p38
      %p45 = scmp.eq.s32.totalorder %s17, 1
      %p46 = por %p44, %p45
      %p47 = scmp.ne.s32.totalorder %s39, %s42
      %p48 = scmp.eq.s32.totalorder %s17, 0
      %p49 = por %p47, %p48
      %p50 = scmp.ne.s32.totalorder %s39, %s42
      %p51 = scmp.eq.s32.totalorder %s22, 1
      %p52 = por %p50, %p51
      %p53 = scmp.ne.s32.totalorder %s42, %s43
      %p54 = scmp.eq.s32.totalorder %s22, 0
      %p55 = por %p53, %p54
      %p56 = scmp.ne.s32.totalorder %s42, %s43
      %p57 = scmp.eq.s32.totalorder %s23, 1
      %p58 = por %p56, %p57
      %p60 = scmp.ne.s32.totalorder %s43, %s59
      %p61 = scmp.eq.s32.totalorder %s23, 0
      %p62 = por %p60, %p61
      %s63 = ssub.s32 %s25, %s32
      %p64 = scmp.eq.s32.totalorder %s63, 0
      %s66 = sadd.s32 %s65, 1
      %s67 = scalar_select %p64, %s65, %s66
      %p70 = pneg %p64
      %p71 = scmp.eq.s32.totalorder %s17, 1
      %p72 = por %p70, %p71
      %p73 = scmp.ne.s32.totalorder %s65, %s68
      %p74 = scmp.eq.s32.totalorder %s17, 0
      %p75 = por %p73, %p74
      %p76 = scmp.ne.s32.totalorder %s65, %s68
      %p77 = scmp.eq.s32.totalorder %s22, 1
      %p78 = por %p76, %p77
      %p79 = scmp.ne.s32.totalorder %s68, %s69
      %p80 = scmp.eq.s32.totalorder %s22, 0
      %p81 = por %p79, %p80
      %p82 = scmp.ne.s32.totalorder %s68, %s69
      %p83 = scmp.eq.s32.totalorder %s23, 1
      %p84 = por %p82, %p83
      %p86 = scmp.ne.s32.totalorder %s69, %s85
      %p87 = scmp.eq.s32.totalorder %s23, 0
      %p88 = por %p86, %p87
      %s89 = ssub.s32 %s25, %s32
      %p90 = scmp.eq.s32.totalorder %s89, 0
      %s92 = sadd.s32 %s91, 1
      %s93 = scalar_select %p90, %s91, %s92
      %p96 = pneg %p90
      %p97 = scmp.eq.s32.totalorder %s17, 1
      %p98 = por %p96, %p97
      %p99 = scmp.ne.s32.totalorder %s91, %s94
      %p100 = scmp.eq.s32.totalorder %s17, 0
      %p101 = por %p99, %p100
      %p102 = scmp.ne.s32.totalorder %s91, %s94
      %p103 = scmp.eq.s32.totalorder %s22, 1
      %p104 = por %p102, %p103
      %p105 = scmp.ne.s32.totalorder %s94, %s95
      %p106 = scmp.eq.s32.totalorder %s22, 0
      %p107 = por %p105, %p106
      %p108 = scmp.ne.s32.totalorder %s94, %s95
      %p109 = scmp.eq.s32.totalorder %s23, 1
      %p110 = por %p108, %p109
      %p112 = scmp.ne.s32.totalorder %s95, %s111
      %p113 = scmp.eq.s32.totalorder %s23, 0
      %p114 = por %p112, %p113
      %s116 = sadd.s32 %s115, 1
      %p119 = scmp.eq.s32.totalorder %s17, 1
      %p120 = scmp.ne.s32.totalorder %s115, %s117
      %p121 = scmp.eq.s32.totalorder %s17, 0
      %p122 = por %p120, %p121
      %p123 = scmp.ne.s32.totalorder %s115, %s117
      %p124 = scmp.eq.s32.totalorder %s22, 1
      %p125 = por %p123, %p124
      %p126 = scmp.ne.s32.totalorder %s117, %s118
      %p127 = scmp.eq.s32.totalorder %s22, 0
      %p128 = por %p126, %p127
      %p129 = scmp.ne.s32.totalorder %s117, %s118
      %p130 = scmp.eq.s32.totalorder %s23, 1
      %p131 = por %p129, %p130
      %p133 = scmp.ne.s32.totalorder %s118, %s132
      %p134 = scmp.eq.s32.totalorder %s23, 0
      %p135 = por %p133, %p134
      %s136 = ssub.s32 %s24, %s36
      %s137 = ssub.s32 %s25, %s32
      %s138 = sor.u32 %s136, %s137
      %p139 = scmp.eq.s32.totalorder %s138, 0
      %s141 = sadd.s32 %s140, 1
      %s142 = scalar_select %p139, %s140, %s141
      %p145 = pneg %p139
      %p146 = scmp.eq.s32.totalorder %s17, 1
      %p147 = por %p145, %p146
      %p148 = scmp.ne.s32.totalorder %s140, %s143
      %p149 = scmp.eq.s32.totalorder %s17, 0
      %p150 = por %p148, %p149
      %p151 = scmp.ne.s32.totalorder %s140, %s143
      %p152 = scmp.eq.s32.totalorder %s22, 1
      %p153 = por %p151, %p152
      %p154 = scmp.ne.s32.totalorder %s143, %s144
      %p155 = scmp.eq.s32.totalorder %s22, 0
      %p156 = por %p154, %p155
      %p157 = scmp.ne.s32.totalorder %s143, %s144
      %p158 = scmp.eq.s32.totalorder %s23, 1
      %p159 = por %p157, %p158
      %p161 = scmp.ne.s32.totalorder %s144, %s160
      %p162 = scmp.eq.s32.totalorder %s23, 0
      %p163 = por %p161, %p162
      %p164 = scmp.le.s32.totalorder 1, %s17
      %p165 = scmp.lt.s32.totalorder %s17, 3
      %p166 = pnand %p164, %p165
      %p167 = pneg %p166
      // Predicated region
      $region9: #{tpu_custom_call.1} parent=5 // pred_check
        _
      $region10: #{tpu_custom_call.1} parent=5 // pred_check_branch
        %169 = sbr.rel (%p166) target = $region12
      $region11: #{tpu_custom_call.1} parent=5 // pred_region
        %s170 = ssub.s32 %s17, 1
        // Predicated region
        $region13: #{tpu_custom_call.1} parent=11 // pred_check
          %p171 = pneg %p81
        $region14: #{tpu_custom_call.1} parent=11 // pred_check_branch
          %173 = sbr.rel (%p171) target = $region16
        $region15: #{tpu_custom_call.1} parent=11 // pred_region
          %s175 = ssub.s32 2048, 2048
          %176 = vsyncadd [#allocation7], %s175
          %s177 = smul.addr %s27, 128
          %s178 = scalar_lea.hbm %s1, %s177
          %s179 = sshll.u32 [#allocation6], 4
          %s180 = int_to_ptr.vmem [resolvable:$true] %s179
          %185 = dma.hbm_to_vmem [thread:$0]  %s178, 2048, %s180, [#allocation7], 128, 128, 8
        $region16: #{tpu_custom_call.1} parent=11 // pred_fallthru
          _
        // Predicated region
        $region17: #{tpu_custom_call.1} parent=11 // pred_check
          %p186 = pneg %p107
        $region18: #{tpu_custom_call.1} parent=11 // pred_check_branch
          %188 = sbr.rel (%p186) target = $region20
        $region19: #{tpu_custom_call.1} parent=11 // pred_region
          %s190 = ssub.s32 2048, 2048
          %191 = vsyncadd [#allocation7], %s190
          %s192 = smul.addr %s27, 128
          %s193 = scalar_lea.hbm %s2, %s192
          %s194 = sshll.u32 [#allocation8], 4
          %s195 = int_to_ptr.vmem [resolvable:$true] %s194
          %200 = dma.hbm_to_vmem [thread:$0]  %s193, 2048, %s195, [#allocation7], 128, 128, 8
        $region20: #{tpu_custom_call.1} parent=11 // pred_fallthru
          _
        // Predicated region
        $region21: #{tpu_custom_call.1} parent=11 // pred_check
          %p201 = pneg %p128
        $region22: #{tpu_custom_call.1} parent=11 // pred_check_branch
          %203 = sbr.rel (%p201) target = $region24
        $region23: #{tpu_custom_call.1} parent=11 // pred_region
          _
        $region24: #{tpu_custom_call.1} parent=11 // pred_fallthru
          _
      $region12: #{tpu_custom_call.1} parent=5 // pred_fallthru
        _
      %p204 = scmp.lt.s32.totalorder %s17, 2
      // Predicated region
      $region25: #{tpu_custom_call.1} parent=5 // pred_check
        %p205 = pneg %p204
      $region26: #{tpu_custom_call.1} parent=5 // pred_check_branch
        %207 = sbr.rel (%p205) target = $region28
      $region27: #{tpu_custom_call.1} parent=5 // pred_region
        // Predicated region
        $region29: #{tpu_custom_call.1} parent=27 // pred_check
          %p208 = pneg %p49
        $region30: #{tpu_custom_call.1} parent=27 // pred_check_branch
          %210 = sbr.rel (%p208) target = $region32
        $region31: #{tpu_custom_call.1} parent=27 // pred_region
          %s211 = sand.u32 %s39, 1
          %s212 = scalar_lea.sflag [#allocation4], %s211
          %s213 = sand.u32 %s39, 1
          %s214 = smul.addr %s213, 8
          %s215 = scalar_lea.vmem [#allocation3], %s214
          %s217 = ssub.s32 128, 128
          %218 = vsyncadd %s212, %s217
          %s219 = smul.addr %s24, 128
          %s220 = scalar_lea.hbm %s0, %s219
          %s222 = sshll.u32 %s215, 4
          %s223 = int_to_ptr.vmem [resolvable:$true] %s222
          %225 = dma.hbm_to_vmem [thread:$0]  %s220, 128, %s223, %s212
        $region32: #{tpu_custom_call.1} parent=27 // pred_fallthru
          _
      $region28: #{tpu_custom_call.1} parent=5 // pred_fallthru
        _
      %p226 = scmp.le.s32.totalorder 1, %s17
      %p227 = scmp.lt.s32.totalorder %s17, 3
      %p228 = pnand %p226, %p227
      %p229 = pneg %p228
      // Predicated region
      $region33: #{tpu_custom_call.1} parent=5 // pred_check
        _
      $region34: #{tpu_custom_call.1} parent=5 // pred_check_branch
        %231 = sbr.rel (%p228) target = $region36
      $region35: #{tpu_custom_call.1} parent=5 // pred_region
        %s232 = ssub.s32 %s17, 1
        %s233 = sand.u32 %s42, 1
        %s234 = scalar_lea.sflag [#allocation4], %s233
        %s235 = sand.u32 %s42, 1
        %s236 = smul.addr %s235, 8
        %s237 = scalar_lea.vmem [#allocation3], %s236
        // Predicated region
        $region37: #{tpu_custom_call.1} parent=35 // pred_check
          %p238 = pneg %p55
        $region38: #{tpu_custom_call.1} parent=35 // pred_check_branch
          %240 = sbr.rel (%p238) target = $region40
        $region39: #{tpu_custom_call.1} parent=35 // pred_region
          %241 = dma.done %s234, 128
        $region40: #{tpu_custom_call.1} parent=35 // pred_fallthru
          _
        // Predicated region
        $region41: #{tpu_custom_call.1} parent=35 // pred_check
          %p242 = pneg %p81
        $region42: #{tpu_custom_call.1} parent=35 // pred_check_branch
          %244 = sbr.rel (%p242) target = $region44
        $region43: #{tpu_custom_call.1} parent=35 // pred_region
          %245 = dma.done [#allocation7], 2048
        $region44: #{tpu_custom_call.1} parent=35 // pred_fallthru
          _
        // Predicated region
        $region45: #{tpu_custom_call.1} parent=35 // pred_check
          %p246 = pneg %p107
        $region46: #{tpu_custom_call.1} parent=35 // pred_check_branch
          %248 = sbr.rel (%p246) target = $region48
        $region47: #{tpu_custom_call.1} parent=35 // pred_region
          %249 = dma.done [#allocation7], 2048
        $region48: #{tpu_custom_call.1} parent=35 // pred_fallthru
          _
        %s250 = sand.u32 %s42, 1
        %s251 = scalar_lea.sflag [#allocation4], %s250
        %s252 = sand.u32 %s42, 1
        %s253 = smul.addr %s252, 8
        %s254 = scalar_lea.vmem [#allocation3], %s253
        %p255 = pneg %p55
        %p256 = pneg %p52
        %p257 = pneg %p81
        %p258 = pneg %p78
        %p259 = pneg %p107
        %p260 = pneg %p104
        %p261 = pneg %p128
        %p262 = pneg %p125
        %p263 = pneg %p156
        %p264 = pneg %p153
        %s265 = sand.u32 %s143, 1
        %s266 = scalar_lea.sflag [#allocation5], %s265
        %s267 = sand.u32 %s143, 1
        %s268 = smul.addr %s267, 8
        %s269 = scalar_lea.vmem [#allocation9], %s268
        %v270 = vld [vmem:[%s237] sm:$0xff]
        %v271 = vld [vmem:[#allocation6] sm:$0xff]
        %v272 = vld [vmem:[#allocation6 + $0x8] sm:$0xff]
        %v273 = vld [vmem:[#allocation6 + $0x10] sm:$0xff]
        %v274 = vld [vmem:[#allocation6 + $0x18] sm:$0xff]
        %v275 = vld [vmem:[#allocation6 + $0x20] sm:$0xff]
        %v276 = vld [vmem:[#allocation6 + $0x28] sm:$0xff]
        %v277 = vld [vmem:[#allocation6 + $0x30] sm:$0xff]
        %v278 = vld [vmem:[#allocation6 + $0x38] sm:$0xff]
        %v279 = vld [vmem:[#allocation6 + $0x40] sm:$0xff]
        %v280 = vld [vmem:[#allocation6 + $0x48] sm:$0xff]
        %v281 = vld [vmem:[#allocation6 + $0x50] sm:$0xff]
        %v282 = vld [vmem:[#allocation6 + $0x58] sm:$0xff]
        %v283 = vld [vmem:[#allocation6 + $0x60] sm:$0xff]
        %v284 = vld [vmem:[#allocation6 + $0x68] sm:$0xff]
        %v285 = vld [vmem:[#allocation6 + $0x70] sm:$0xff]
        %v286 = vld [vmem:[#allocation6 + $0x78] sm:$0xff]
        %287 = vmatprep.subr.mxu0 0.0
        %288 = vmatpush1.msra.mxu0 %v271
        %289 = vmatprep.subr.mxu0 0.0
        %290 = vmatpush1.msra.mxu0 %v272
        %291 = vmatprep.subr.mxu0 0.0
        %292 = vmatpush1.msra.mxu0 %v273
        %293 = vmatprep.subr.mxu0 0.0
        %294 = vmatpush1.msra.mxu0 %v274
        %295 = vmatprep.subr.mxu0 0.0
        %296 = vmatpush1.msra.mxu0 %v275
        %297 = vmatprep.subr.mxu0 0.0
        %298 = vmatpush1.msra.mxu0 %v276
        %299 = vmatprep.subr.mxu0 0.0
        %300 = vmatpush1.msra.mxu0 %v277
        %301 = vmatprep.subr.mxu0 0.0
        %302 = vmatpush1.msra.mxu0 %v278
        %303 = vmatprep.subr.mxu0 0.0
        %304 = vmatpush1.msra.mxu0 %v279
        %305 = vmatprep.subr.mxu0 0.0
        %306 = vmatpush1.msra.mxu0 %v280
        %307 = vmatprep.subr.mxu0 0.0
        %308 = vmatpush1.msra.mxu0 %v281
        %309 = vmatprep.subr.mxu0 0.0
        %310 = vmatpush1.msra.mxu0 %v282
        %311 = vmatprep.subr.mxu0 0.0
        %312 = vmatpush1.msra.mxu0 %v283
        %313 = vmatprep.subr.mxu0 0.0
        %314 = vmatpush1.msra.mxu0 %v284
        %315 = vmatprep.subr.mxu0 0.0
        %316 = vmatpush1.msra.mxu0 %v285
        %317 = vmatprep.subr.mxu0 0.0
        %318 = vmatpush1.msra.mxu0 %v286
        %319 = vmatprep.subr.mxu0 0.0
        %320 = vmatpush1.msra.mxu0 0.0
        %321 = vmatprep.subr.mxu0 0.0
        %322 = vmatpush1.msra.mxu0 0.0
        %323 = vmatprep.subr.mxu0 0.0
        %324 = vmatpush1.msra.mxu0 0.0
        %325 = vmatprep.subr.mxu0 0.0
        %326 = vmatpush1.msra.mxu0 0.0
        %327 = vmatprep.subr.mxu0 0.0
        %328 = vmatpush1.msra.mxu0 0.0
        %329 = vmatprep.subr.mxu0 0.0
        %330 = vmatpush1.msra.mxu0 0.0
        %331 = vmatprep.subr.mxu0 0.0
        %332 = vmatpush1.msra.mxu0 0.0
        %333 = vmatprep.subr.mxu0 0.0
        %334 = vmatpush1.msra.mxu0 0.0
        %335 = vmatprep.subr.mxu0 0.0
        %336 = vmatpush1.msra.mxu0 0.0
        %337 = vmatprep.subr.mxu0 0.0
        %338 = vmatpush1.msra.mxu0 0.0
        %339 = vmatprep.subr.mxu0 0.0
        %340 = vmatpush1.msra.mxu0 0.0
        %341 = vmatprep.subr.mxu0 0.0
        %342 = vmatpush1.msra.mxu0 0.0
        %343 = vmatprep.subr.mxu0 0.0
        %344 = vmatpush1.msra.mxu0 0.0
        %345 = vmatprep.subr.mxu0 0.0
        %346 = vmatpush1.msra.mxu0 0.0
        %347 = vmatprep.subr.mxu0 0.0
        %348 = vmatpush1.msra.mxu0 0.0
        %349 = vmatprep.subr.mxu0 0.0
        %350 = vmatpush1.msra.mxu0 0.0
        %351 = vmatprep.mubr.f32.mxu0 0.0
        %352 = vmatmul.mubr.f32.gmra.mrb[0].mxu0 %v270
        %v353 = vpop.f32.mrb[0].mxu0
        %v354 = vadd.f32 0.0, %v353
        %v355 = vpop.f32.mrb[0].mxu0
        %356 = vdwg.mxu0
        %v357 = vld [vmem:[#allocation8] sm:$0xff]
        %v358 = vld [vmem:[#allocation8 + $0x8] sm:$0xff]
        %v359 = vld [vmem:[#allocation8 + $0x10] sm:$0xff]
        %v360 = vld [vmem:[#allocation8 + $0x18] sm:$0xff]
        %v361 = vld [vmem:[#allocation8 + $0x20] sm:$0xff]
        %v362 = vld [vmem:[#allocation8 + $0x28] sm:$0xff]
        %v363 = vld [vmem:[#allocation8 + $0x30] sm:$0xff]
        %v364 = vld [vmem:[#allocation8 + $0x38] sm:$0xff]
        %v365 = vld [vmem:[#allocation8 + $0x40] sm:$0xff]
        %v366 = vld [vmem:[#allocation8 + $0x48] sm:$0xff]
        %v367 = vld [vmem:[#allocation8 + $0x50] sm:$0xff]
        %v368 = vld [vmem:[#allocation8 + $0x58] sm:$0xff]
        %v369 = vld [vmem:[#allocation8 + $0x60] sm:$0xff]
        %v370 = vld [vmem:[#allocation8 + $0x68] sm:$0xff]
        %v371 = vld [vmem:[#allocation8 + $0x70] sm:$0xff]
        %v372 = vld [vmem:[#allocation8 + $0x78] sm:$0xff]
        %373 = vmatprep.subr.mxu0 0.0
        %374 = vmatpush1.msra.mxu0 %v357
        %375 = vmatprep.subr.mxu0 0.0
        %376 = vmatpush1.msra.mxu0 %v358
        %377 = vmatprep.subr.mxu0 0.0
        %378 = vmatpush1.msra.mxu0 %v359
        %379 = vmatprep.subr.mxu0 0.0
        %380 = vmatpush1.msra.mxu0 %v360
        %381 = vmatprep.subr.mxu0 0.0
        %382 = vmatpush1.msra.mxu0 %v361
        %383 = vmatprep.subr.mxu0 0.0
        %384 = vmatpush1.msra.mxu0 %v362
        %385 = vmatprep.subr.mxu0 0.0
        %386 = vmatpush1.msra.mxu0 %v363
        %387 = vmatprep.subr.mxu0 0.0
        %388 = vmatpush1.msra.mxu0 %v364
        %389 = vmatprep.subr.mxu0 0.0
        %390 = vmatpush1.msra.mxu0 %v365
        %391 = vmatprep.subr.mxu0 0.0
        %392 = vmatpush1.msra.mxu0 %v366
        %393 = vmatprep.subr.mxu0 0.0
        %394 = vmatpush1.msra.mxu0 %v367
        %395 = vmatprep.subr.mxu0 0.0
        %396 = vmatpush1.msra.mxu0 %v368
        %397 = vmatprep.subr.mxu0 0.0
        %398 = vmatpush1.msra.mxu0 %v369
        %399 = vmatprep.subr.mxu0 0.0
        %400 = vmatpush1.msra.mxu0 %v370
        %401 = vmatprep.subr.mxu0 0.0
        %402 = vmatpush1.msra.mxu0 %v371
        %403 = vmatprep.subr.mxu0 0.0
        %404 = vmatpush1.msra.mxu0 %v372
        %405 = vmatprep.subr.mxu0 0.0
        %406 = vmatpush1.msra.mxu0 0.0
        %407 = vmatprep.subr.mxu0 0.0
        %408 = vmatpush1.msra.mxu0 0.0
        %409 = vmatprep.subr.mxu0 0.0
        %410 = vmatpush1.msra.mxu0 0.0
        %411 = vmatprep.subr.mxu0 0.0
        %412 = vmatpush1.msra.mxu0 0.0
        %413 = vmatprep.subr.mxu0 0.0
        %414 = vmatpush1.msra.mxu0 0.0
        %415 = vmatprep.subr.mxu0 0.0
        %416 = vmatpush1.msra.mxu0 0.0
        %417 = vmatprep.subr.mxu0 0.0
        %418 = vmatpush1.msra.mxu0 0.0
        %419 = vmatprep.subr.mxu0 0.0
        %420 = vmatpush1.msra.mxu0 0.0
        %421 = vmatprep.subr.mxu0 0.0
        %422 = vmatpush1.msra.mxu0 0.0
        %423 = vmatprep.subr.mxu0 0.0
        %424 = vmatpush1.msra.mxu0 0.0
        %425 = vmatprep.subr.mxu0 0.0
        %426 = vmatpush1.msra.mxu0 0.0
        %427 = vmatprep.subr.mxu0 0.0
        %428 = vmatpush1.msra.mxu0 0.0
        %429 = vmatprep.subr.mxu0 0.0
        %430 = vmatpush1.msra.mxu0 0.0
        %431 = vmatprep.subr.mxu0 0.0
        %432 = vmatpush1.msra.mxu0 0.0
        %433 = vmatprep.subr.mxu0 0.0
        %434 = vmatpush1.msra.mxu0 0.0
        %435 = vmatprep.subr.mxu0 0.0
        %436 = vmatpush1.msra.mxu0 0.0
        %437 = vmatprep.mubr.f32.mxu0 0.0
        %438 = vmatmul.mubr.f32.gmra.mrb[0].mxu0 %v270
        %v439 = vpop.f32.mrb[0].mxu0
        %v440 = vadd.f32 0.0, %v439
        %v441 = vpop.f32.mrb[0].mxu0
        %442 = vdwg.mxu0
        %443 = vst [vmem:[#allocation2] sm:$0xff] %v354
        %s444 = scalar_lea.vmem [#allocation2], 8
        %445 = vst [vmem:[%s444] sm:$0xff] %v440
        %v446 = vld [vmem:[%s3] sm:$0xff]
        %v447 = vld [vmem:[#allocation2] sm:$0xff]
        %v448 = vld [vmem:[#allocation2 + $0x8] sm:$0xff]
        %vm449 = vcmask 130048
        %v451 = vsel %vm449, %v446, 0
        %453 = vmatprep.subr.mxu0 0.0
        %454 = vmatpush1.msra.mxu0 %v447
        %455 = vmatprep.subr.mxu0 0.0
        %456 = vmatpush1.msra.mxu0 %v448
        %457 = vmatprep.subr.mxu0 0.0
        %458 = vmatpush1.msra.mxu0 0.0
        %459 = vmatprep.subr.mxu0 0.0
        %460 = vmatpush1.msra.mxu0 0.0
        %461 = vmatprep.subr.mxu0 0.0
        %462 = vmatpush1.msra.mxu0 0.0
        %463 = vmatprep.subr.mxu0 0.0
        %464 = vmatpush1.msra.mxu0 0.0
        %465 = vmatprep.subr.mxu0 0.0
        %466 = vmatpush1.msra.mxu0 0.0
        %467 = vmatprep.subr.mxu0 0.0
        %468 = vmatpush1.msra.mxu0 0.0
        %469 = vmatprep.subr.mxu0 0.0
        %470 = vmatpush1.msra.mxu0 0.0
        %471 = vmatprep.subr.mxu0 0.0
        %472 = vmatpush1.msra.mxu0 0.0
        %473 = vmatprep.subr.mxu0 0.0
        %474 = vmatpush1.msra.mxu0 0.0
        %475 = vmatprep.subr.mxu0 0.0
        %476 = vmatpush1.msra.mxu0 0.0
        %477 = vmatprep.subr.mxu0 0.0
        %478 = vmatpush1.msra.mxu0 0.0
        %479 = vmatprep.subr.mxu0 0.0
        %480 = vmatpush1.msra.mxu0 0.0
        %481 = vmatprep.subr.mxu0 0.0
        %482 = vmatpush1.msra.mxu0 0.0
        %483 = vmatprep.subr.mxu0 0.0
        %484 = vmatpush1.msra.mxu0 0.0
        %485 = vmatprep.subr.mxu0 0.0
        %486 = vmatpush1.msra.mxu0 0.0
        %487 = vmatprep.subr.mxu0 0.0
        %488 = vmatpush1.msra.mxu0 0.0
        %489 = vmatprep.subr.mxu0 0.0
        %490 = vmatpush1.msra.mxu0 0.0
        %491 = vmatprep.subr.mxu0 0.0
        %492 = vmatpush1.msra.mxu0 0.0
        %493 = vmatprep.subr.mxu0 0.0
        %494 = vmatpush1.msra.mxu0 0.0
        %495 = vmatprep.subr.mxu0 0.0
        %496 = vmatpush1.msra.mxu0 0.0
        %497 = vmatprep.subr.mxu0 0.0
        %498 = vmatpush1.msra.mxu0 0.0
        %499 = vmatprep.subr.mxu0 0.0
        %500 = vmatpush1.msra.mxu0 0.0
        %501 = vmatprep.subr.mxu0 0.0
        %502 = vmatpush1.msra.mxu0 0.0
        %503 = vmatprep.subr.mxu0 0.0
        %504 = vmatpush1.msra.mxu0 0.0
        %505 = vmatprep.subr.mxu0 0.0
        %506 = vmatpush1.msra.mxu0 0.0
        %507 = vmatprep.subr.mxu0 0.0
        %508 = vmatpush1.msra.mxu0 0.0
        %509 = vmatprep.subr.mxu0 0.0
        %510 = vmatpush1.msra.mxu0 0.0
        %511 = vmatprep.subr.mxu0 0.0
        %512 = vmatpush1.msra.mxu0 0.0
        %513 = vmatprep.subr.mxu0 0.0
        %514 = vmatpush1.msra.mxu0 0.0
        %515 = vmatprep.subr.mxu0 0.0
        %516 = vmatpush1.msra.mxu0 0.0
        %517 = vmatprep.mubr.f32.mxu0 0.0
        %518 = vmatmul.mubr.f32.gmra.mrb[0].mxu0 %v451
        %v519 = vpop.f32.mrb[0].mxu0
        %v520 = vadd.f32 0.0, %v519
        %v521 = vpop.f32.mrb[0].mxu0
        %522 = vdwg.mxu0
        %523 = vst [vmem:[%s269] sm:$0xff] %v520
        %s524 = sand.u32 %s143, 1
        %s525 = scalar_lea.sflag [#allocation5], %s524
        %s526 = sand.u32 %s143, 1
        %s527 = smul.addr %s526, 8
        %s528 = scalar_lea.vmem [#allocation9], %s527
        // Predicated region
        $region49: #{tpu_custom_call.1} parent=35 // pred_check
          %p529 = pneg %p153
        $region50: #{tpu_custom_call.1} parent=35 // pred_check_branch
          %531 = sbr.rel (%p529) target = $region52
        $region51: #{tpu_custom_call.1} parent=35 // pred_region
          %s533 = ssub.s32 128, 128
          %534 = vsyncadd %s525, %s533
          %s535 = sadd.s32 %s27, %s26
          %s536 = smul.addr %s535, 128
          %s537 = scalar_lea.hbm %s4, %s536
          %s539 = sshll.u32 %s528, 4
          %s540 = int_to_ptr.vmem [resolvable:$true] %s539
          %542 = dma.vmem_to_hbm [thread:$0]  %s540, 128, %s537, %s525
        $region52: #{tpu_custom_call.1} parent=35 // pred_fallthru
          _
      $region36: #{tpu_custom_call.1} parent=5 // pred_fallthru
        _
      %p543 = scmp.le.s32.totalorder 2, %s17
      // Predicated region
      $region53: #{tpu_custom_call.1} parent=5 // pred_check
        %p544 = pneg %p543
      $region54: #{tpu_custom_call.1} parent=5 // pred_check_branch
        %546 = sbr.rel (%p544) target = $region56
      $region55: #{tpu_custom_call.1} parent=5 // pred_region
        %s547 = ssub.s32 %s17, 2
        // Predicated region
        $region57: #{tpu_custom_call.1} parent=55 // pred_check
          %p548 = pneg %p159
        $region58: #{tpu_custom_call.1} parent=55 // pred_check_branch
          %550 = sbr.rel (%p548) target = $region60
        $region59: #{tpu_custom_call.1} parent=55 // pred_region
          %s551 = sand.u32 %s144, 1
          %s552 = scalar_lea.sflag [#allocation5], %s551
          %s553 = sand.u32 %s144, 1
          %s554 = smul.addr %s553, 8
          %s555 = scalar_lea.vmem [#allocation9], %s554
          %556 = dma.done %s552, 128
        $region60: #{tpu_custom_call.1} parent=55 // pred_fallthru
          _
      $region56: #{tpu_custom_call.1} parent=5 // pred_fallthru
        _
    $region6: #{tpu_custom_call.1} parent=1 // loop_footer
      %s21 = sadd.s32 1, %s17
    $region7: #{tpu_custom_call.1} parent=1 // loop_footer_branch
      %16 = sbr.rel target = $region3
    $region8: #{tpu_custom_call.1} parent=1 // loop_exit
      _
    %557 = vsyncpa [#allocation4], 1
    %s558 = scalar_lea.sflag [#allocation4], 1
    %559 = vsyncpa %s558, 1
    %560 = vsyncpa [#allocation7], 1
    %561 = vsyncpa [#allocation5], 1
    %s562 = scalar_lea.sflag [#allocation5], 1
    %563 = vsyncpa %s562, 1

</llo_original>
